<compile_context>
chip_gen: v5e
topology: v5e:2x2
jax: 0.10.0
libtpu: 0.0.40
codegen_flags: <defaults>
</compile_context>

<pallas_src>
import functools

import jax
import jax.numpy as jnp
from jax import lax
from jax.experimental import pallas as pl
from jax.experimental.pallas import tpu as pltpu


# ----------------------------------------------------------------------------
# Fused single-kernel path (weights VMEM-resident, feature-major activations).
# ----------------------------------------------------------------------------
def _fused_mlp_kernel(x_ref, w1_ref, w2_ref, bw_ref, b3_ref, o_ref):
    # x tile is (tb, size) in the input dtype: cast on the VPU; the transpose to
    # feature-major happens inside dot_general (no separate XLA pass over x).
    xb = x_ref[...].astype(jnp.bfloat16)

    b1 = bw_ref[:, 0:1]          # (size, 1)
    b2 = bw_ref[:, 1:2]
    w3 = bw_ref[:, 2:3]

    # fc1 + relu:  h1^T = W1 @ x^T  -> (size, tb), batch on lanes. bf16 MXU, f32 acc.
    h1 = lax.dot_general(w1_ref[...], xb,
                         dimension_numbers=(((1,), (1,)), ((), ())),
                         preferred_element_type=jnp.float32)
    h1 = jnp.maximum(h1 + b1, 0.0)

    # fc2 + relu
    h2 = jnp.dot(w2_ref[...], h1.astype(jnp.bfloat16),
                 preferred_element_type=jnp.float32)
    h2 = jnp.maximum(h2 + b2, 0.0)

    # fc3 (size -> 1): VPU multiply + sublane reduce (no wasted N=1 MXU pass).
    # Result (1, tb) -> lane-dense store.
    y = jnp.sum(h2 * w3, axis=0, keepdims=True) + b3_ref[0]
    o_ref[...] = y.astype(o_ref.dtype)


def _forward_fused(x, w1b, w2b, bw, b3c, out_dtype, tb, vmem_limit, x_bufs):
    B, size = x.shape
    Bp = pl.cdiv(B, tb) * tb
    if Bp != B:
        x = jnp.pad(x, ((0, Bp - B), (0, 0)))     # avoid OOB reads on ragged batch
    grid = (Bp // tb,)

    def build(weight_bufs, x_bufs_):
        def spec(shape, index_map, bufs):
            if bufs == 2:                          # default double-buffering
                return pl.BlockSpec(shape, index_map)
            return pl.BlockSpec(shape, index_map, pipeline_mode=pl.Buffered(bufs))

        resident = lambda shape: spec(shape, lambda i: (0, 0), weight_bufs)
        return pl.pallas_call(
            _fused_mlp_kernel,
            out_shape=jax.ShapeDtypeStruct((1, Bp), out_dtype),
            grid_spec=pltpu.PrefetchScalarGridSpec(
                num_scalar_prefetch=0,
                grid=grid,
                in_specs=[
                    spec((tb, size), lambda i: (i, 0), x_bufs_),   # x batch tile
                    resident((size, size)),                        # w1 (bf16, resident)
                    resident((size, size)),                        # w2 (bf16, resident)
                    resident((size, 3)),                           # packed [b1|b2|w3] f32
                    pl.BlockSpec(memory_space=pltpu.MemorySpace.SMEM),  # b3 scalar
                ],
                out_specs=pl.BlockSpec((1, tb), lambda i: (0, i)),  # lane-dense output slab
            ),
            compiler_params=pltpu.CompilerParams(
                dimension_semantics=("parallel",),
                vmem_limit_bytes=vmem_limit,
            ),
        )

    try:
        outT = build(1, x_bufs)(x, w1b, w2b, bw, b3c)
    except Exception:
        # Fallback if pipeline_mode=pl.Buffered(...) is unsupported on this jax build.
        outT = build(2, 2)(x, w1b, w2b, bw, b3c)

    # (1, Bp) row-major has the same layout as (Bp, 1): free reshape; drop padding.
    return outT.reshape(Bp, 1)[:B]


# ----------------------------------------------------------------------------
# K-tiled / layer-split fallback for weights that do not fit VMEM.
# ----------------------------------------------------------------------------
def _linear_kernel(x_ref, w_ref, b_ref, o_ref, acc_ref, *, relu):
    k = pl.program_id(2)

    @pl.when(k == 0)
    def _init():
        acc_ref[...] = jnp.zeros_like(acc_ref)

    # x (tm, tk) @ W(tn, tk)^T -> (tm, tn); transpose handled by dot_general.
    acc_ref[...] += lax.dot_general(
        x_ref[...].astype(jnp.bfloat16), w_ref[...],
        dimension_numbers=(((1,), (1,)), ((), ())),
        preferred_element_type=jnp.float32)

    @pl.when(k == pl.num_programs(2) - 1)
    def _fin():
        y = acc_ref[...] + b_ref[...]
        if relu:
            y = jnp.maximum(y, 0.0)
        o_ref[...] = y.astype(o_ref.dtype)


def _linear(x, w_bf16, b_row, *, relu, out_dtype, tm, tn, tk, vmem_limit):
    M, K = x.shape
    N = w_bf16.shape[0]
    grid = (M // tm, N // tn, K // tk)
    return pl.pallas_call(
        functools.partial(_linear_kernel, relu=relu),
        out_shape=jax.ShapeDtypeStruct((M, N), out_dtype),
        grid_spec=pltpu.PrefetchScalarGridSpec(
            num_scalar_prefetch=0,
            grid=grid,
            in_specs=[
                pl.BlockSpec((tm, tk), lambda i, j, k: (i, k)),
                pl.BlockSpec((tn, tk), lambda i, j, k: (j, k)),
                pl.BlockSpec((1, tn), lambda i, j, k: (0, j)),
            ],
            out_specs=pl.BlockSpec((tm, tn), lambda i, j, k: (i, j)),
            scratch_shapes=[pltpu.VMEM((tm, tn), jnp.float32)],
        ),
        compiler_params=pltpu.CompilerParams(
            dimension_semantics=("parallel", "parallel", "arbitrary"),
            vmem_limit_bytes=vmem_limit,
        ),
    )(x, w_bf16, b_row)


def _fc3_kernel(x_ref, w3_ref, b3_ref, o_ref, acc_ref):
    k = pl.program_id(1)

    @pl.when(k == 0)
    def _init():
        acc_ref[...] = jnp.zeros_like(acc_ref)

    # (tm, tk) * (1, tk) -> lane reduce -> (tm, 1). VPU + XLU, no N=1 MXU pass.
    acc_ref[...] += jnp.sum(x_ref[...] * w3_ref[...], axis=1, keepdims=True)

    @pl.when(k == pl.num_programs(1) - 1)
    def _fin():
        o_ref[...] = (acc_ref[...] + b3_ref[0]).astype(o_ref.dtype)


def _fc3(x, w3_row, b3, out_dtype, *, tm, tk, vmem_limit):
    M, K = x.shape
    grid = (M // tm, K // tk)
    return pl.pallas_call(
        _fc3_kernel,
        out_shape=jax.ShapeDtypeStruct((M, 1), out_dtype),
        grid_spec=pltpu.PrefetchScalarGridSpec(
            num_scalar_prefetch=0,
            grid=grid,
            in_specs=[
                pl.BlockSpec((tm, tk), lambda i, k: (i, k)),
                pl.BlockSpec((1, tk), lambda i, k: (0, k)),
                pl.BlockSpec(memory_space=pltpu.MemorySpace.SMEM),
            ],
            out_specs=pl.BlockSpec((tm, 1), lambda i, k: (i, 0)),
            scratch_shapes=[pltpu.VMEM((tm, 1), jnp.float32)],
        ),
        compiler_params=pltpu.CompilerParams(
            dimension_semantics=("parallel", "arbitrary"),
            vmem_limit_bytes=vmem_limit,
        ),
    )(x, w3_row, b3)


def _divisor_tile(d, pref):
    """Largest multiple of 128 that divides d and is <= pref (else full d)."""
    if d <= pref or d % 128 != 0:
        return d
    t = (pref // 128) * 128
    while t >= 128 and d % t != 0:
        t -= 128
    return t if t >= 128 else d


def _forward_layered(x, w1b, b1r, w2b, b2r, w3_row, b3c, out_dtype, vmem_limit):
    B, size = x.shape
    tm = 256 if B >= 256 else B
    Bp = pl.cdiv(B, tm) * tm
    if Bp != B:
        x = jnp.pad(x, ((0, Bp - B), (0, 0)))
    tn = _divisor_tile(size, 256)
    tk = _divisor_tile(size, 512)
    h1 = _linear(x, w1b, b1r, relu=True, out_dtype=jnp.bfloat16,
                 tm=tm, tn=tn, tk=tk, vmem_limit=vmem_limit)
    h2 = _linear(h1, w2b, b2r, relu=True, out_dtype=jnp.float32,
                 tm=tm, tn=tn, tk=tk, vmem_limit=vmem_limit)
    y = _fc3(h2, w3_row, b3c, out_dtype,
             tm=tm, tk=_divisor_tile(size, 1024), vmem_limit=vmem_limit)
    return y[:B]


# ----------------------------------------------------------------------------
# Wrapper: tiling heuristics, VMEM budgeting, path selection.
# ----------------------------------------------------------------------------
def _vmem_limit_bytes():
    try:
        cap = int(pltpu.get_tpu_info().vmem_capacity_bytes)
    except Exception:
        cap = 64 * 1024 * 1024
    # ~100 MiB on 128 MiB chips (v5e/v6e), ~56 MiB on v7x's 64 MiB.
    return max(32 * 1024 * 1024, min(cap - 8 * 1024 * 1024, 100 * 1024 * 1024))


def _pick_tb(B, size):
    if B <= 256:
        return B
    steps = 4 if B >= 512 else 2              # >= 2 steps per TensorCore on v7x
    tb = ((pl.cdiv(B, steps) + 127) // 128) * 128
    tb = max(128, min(tb, 1024))
    if size >= 2048:
        tb = min(tb, 256)                     # fused f32 activation scratch gets big
    return tb


def _fused_vmem_bytes(size, tb, x_bytes, o_bytes, x_bufs):
    weights = 2 * size * size * 2             # w1, w2 bf16, single-buffered
    packed = size * 128 * 4                   # (size, 3) f32 pads to 128 lanes
    x_tiles = x_bufs * tb * size * x_bytes
    o_tiles = 2 * 8 * tb * o_bytes
    act = (4 + 2 + 4) * size * tb             # h1 f32 + h1 bf16 + h2 f32 temporaries
    return weights + packed + x_tiles + o_tiles + act


def multilayer_net(x, w1, b1, w2, b2, w3, b3, *, tb=None, force_layered=False):
    """Forward pass of MultiLayerNet.

    x : [B, size]; w1, w2 : [size, size] (torch [out, in]); b1, b2 : [size];
    w3 : [1, size]; b3 : [1].  Returns [B, 1] in x.dtype.
    """
    B, size = x.shape
    out_dtype = x.dtype
    vmem_limit = _vmem_limit_bytes()

    w1b = jnp.asarray(w1, jnp.bfloat16)
    w2b = jnp.asarray(w2, jnp.bfloat16)
    b1f = jnp.asarray(b1, jnp.float32)
    b2f = jnp.asarray(b2, jnp.float32)
    w3f = jnp.asarray(w3, jnp.float32).reshape(1, size)
    b3c = jnp.asarray(b3, jnp.float32).reshape(1)

    use_layered = force_layered
    x_bufs = 3 if size <= 512 else 2
    if not use_layered:
        if tb is None:
            tb = _pick_tb(B, size)
        xb_ = jnp.dtype(x.dtype).itemsize
        ob_ = jnp.dtype(out_dtype).itemsize
        budget = int(vmem_limit * 0.75)
        while tb > 128 and _fused_vmem_bytes(size, tb, xb_, ob_, x_bufs) > budget:
            tb = max(128, ((tb // 2) // 128) * 128)
        if _fused_vmem_bytes(size, tb, xb_, ob_, x_bufs) > budget:
            use_layered = True                # weights no longer VMEM-resident

    if use_layered:
        return _forward_layered(x, w1b, b1f.reshape(1, size), w2b,
                                b2f.reshape(1, size), w3f, b3c,
                                out_dtype, vmem_limit)

    # Pack b1, b2 and the w3 column into one (size, 3) f32 block (one padded
    # VMEM tile instead of three).
    bw = jnp.concatenate([b1f.reshape(size, 1), b2f.reshape(size, 1),
                          w3f.reshape(size, 1)], axis=1)
    return _forward_fused(x, w1b, w2b, bw, b3c, out_dtype, tb, vmem_limit, x_bufs)


def init_params(key, size, dtype=jnp.float32):
    """Deterministic init mimicking nn.Linear's U(-1/sqrt(in), 1/sqrt(in)); torch [out, in]."""
    ks = jax.random.split(key, 6)
    bound = 1.0 / jnp.sqrt(size)
    w1 = jax.random.uniform(ks[0], (size, size), dtype, -bound, bound)
    b1 = jax.random.uniform(ks[1], (size,), dtype, -bound, bound)
    w2 = jax.random.uniform(ks[2], (size, size), dtype, -bound, bound)
    b2 = jax.random.uniform(ks[3], (size,), dtype, -bound, bound)
    w3 = jax.random.uniform(ks[4], (1, size), dtype, -bound, bound)
    b3 = jax.random.uniform(ks[5], (1,), dtype, -bound, bound)
    return w1, b1, w2, b2, w3, b3


if __name__ == "__main__":
    key = jax.random.PRNGKey(0)
    k_x, k_p = jax.random.split(key)

    # B=512 -> tb=128, grid=(4,): >= 2 pipelined steps per TensorCore on v7x.
    batch, size = 512, 128
    x = jax.random.normal(k_x, (batch, size), jnp.float32)
    params = init_params(k_p, size)

    out_fused = multilayer_net(x, *params)                        # fused resident-weight path
    out_layer = multilayer_net(x, *params, force_layered=True)    # K-tiled layer-split path
    jax.block_until_ready((out_fused, out_layer))

    # Reference in plain JAX with the same bf16-input / f32-accumulate numerics.
    w1, b1, w2, b2, w3, b3 = params
    xb = x.astype(jnp.bfloat16)
    h = jnp.maximum(jnp.dot(xb, w1.astype(jnp.bfloat16).T,
                            preferred_element_type=jnp.float32) + b1, 0.0)
    h = jnp.maximum(jnp.dot(h.astype(jnp.bfloat16), w2.astype(jnp.bfloat16).T,
                            preferred_element_type=jnp.float32) + b2, 0.0)
    ref = jnp.dot(h, w3.astype(jnp.float32).T,
                  preferred_element_type=jnp.float32) + b3

    assert out_fused.shape == (batch, 1) and out_layer.shape == (batch, 1)
    err_f = float(jnp.max(jnp.abs(out_fused - ref)))
    err_l = float(jnp.max(jnp.abs(out_layer - ref)))
    assert jnp.allclose(out_fused, ref, atol=1e-3, rtol=1e-3), err_f
    assert jnp.allclose(out_layer, ref, atol=1e-3, rtol=1e-3), err_l

    print("KERNEL_OK")
</pallas_src>

<mosaic_0001>
module attributes {stable_mosaic.version = 11 : i64} {
  func.func @_fused_mlp_kernel(%arg0: i32, %arg1: memref<128x128xf32, #tpu.memory_space<vmem>>, %arg2: memref<128x128xbf16, #tpu.memory_space<vmem>>, %arg3: memref<128x128xbf16, #tpu.memory_space<vmem>>, %arg4: memref<128x3xf32, #tpu.memory_space<vmem>>, %arg5: memref<1xf32, #tpu.memory_space<smem>>, %arg6: memref<1x128xf32, #tpu.memory_space<vmem>>) attributes {dimension_semantics = [#tpu.dimension_semantics<parallel>], iteration_bounds = array<i64: 4>, scalar_prefetch = 0 : i64, scratch_operands = 0 : i64, tpu.core_type = #tpu.core_type<tc>, window_params = [{transform_indices = @transform_0, window_bounds = array<i64: 128, 128>}, {pipeline_mode = #tpu.pipeline_mode<synchronous>, transform_indices = @transform_1, window_bounds = array<i64: 128, 128>}, {pipeline_mode = #tpu.pipeline_mode<synchronous>, transform_indices = @transform_2, window_bounds = array<i64: 128, 128>}, {pipeline_mode = #tpu.pipeline_mode<synchronous>, transform_indices = @transform_3, window_bounds = array<i64: 128, 3>}, {transform_indices = @transform_4, window_bounds = array<i64: 1>}, {transform_indices = @transform_5, window_bounds = array<i64: 1, 128>}]} {
    %c0 = arith.constant 0 : index
    %c0_0 = arith.constant 0 : index
    %0 = vector.load %arg1[%c0, %c0_0] : memref<128x128xf32, #tpu.memory_space<vmem>>, vector<128x128xf32>
    %1 = arith.truncf %0 : vector<128x128xf32> to vector<128x128xbf16>
    %c0_1 = arith.constant 0 : index
    %c0_2 = arith.constant 0 : index
    %2 = vector.load %arg4[%c0_1, %c0_2] : memref<128x3xf32, #tpu.memory_space<vmem>>, vector<128x1xf32>
    %c0_3 = arith.constant 0 : index
    %c1 = arith.constant 1 : index
    %3 = vector.load %arg4[%c0_3, %c1] : memref<128x3xf32, #tpu.memory_space<vmem>>, vector<128x1xf32>
    %c0_4 = arith.constant 0 : index
    %c2 = arith.constant 2 : index
    %4 = vector.load %arg4[%c0_4, %c2] : memref<128x3xf32, #tpu.memory_space<vmem>>, vector<128x1xf32>
    %c0_5 = arith.constant 0 : index
    %c0_6 = arith.constant 0 : index
    %5 = vector.load %arg2[%c0_5, %c0_6] : memref<128x128xbf16, #tpu.memory_space<vmem>>, vector<128x128xbf16>
    %cst = arith.constant dense<0.000000e+00> : vector<128x128xf32>
    %6 = tpu.matmul %5, %1, %cst {dimension_numbers = #tpu.dot_dimension_numbers<[1], [1], [0], [0], [0, 0, 1, 0], [], []>} : vector<128x128xbf16>, vector<128x128xbf16>, vector<128x128xf32> -> vector<128x128xf32>
    %7 = vector.broadcast %2 : vector<128x1xf32> to vector<128x128xf32>
    %8 = arith.addf %6, %7 : vector<128x128xf32>
    %cst_7 = arith.constant 0.000000e+00 : f32
    %9 = vector.broadcast %cst_7 : f32 to vector<128x128xf32>
    %10 = arith.maximumf %8, %9 : vector<128x128xf32>
    %c0_8 = arith.constant 0 : index
    %c0_9 = arith.constant 0 : index
    %11 = vector.load %arg3[%c0_8, %c0_9] : memref<128x128xbf16, #tpu.memory_space<vmem>>, vector<128x128xbf16>
    %12 = arith.truncf %10 : vector<128x128xf32> to vector<128x128xbf16>
    %cst_10 = arith.constant dense<0.000000e+00> : vector<128x128xf32>
    %13 = tpu.matmul %11, %12, %cst_10 {dimension_numbers = #tpu.dot_dimension_numbers<[1], [0], [0], [1], [0, 0, 1, 1], [], []>} : vector<128x128xbf16>, vector<128x128xbf16>, vector<128x128xf32> -> vector<128x128xf32>
    %14 = vector.broadcast %3 : vector<128x1xf32> to vector<128x128xf32>
    %15 = arith.addf %13, %14 : vector<128x128xf32>
    %cst_11 = arith.constant 0.000000e+00 : f32
    %16 = vector.broadcast %cst_11 : f32 to vector<128x128xf32>
    %17 = arith.maximumf %15, %16 : vector<128x128xf32>
    %18 = vector.broadcast %4 : vector<128x1xf32> to vector<128x128xf32>
    %19 = arith.mulf %17, %18 : vector<128x128xf32>
    %cst_12 = arith.constant dense<0.000000e+00> : vector<128xf32>
    %20 = vector.multi_reduction <add>, %19, %cst_12 [0] : vector<128x128xf32> to vector<128xf32>
    %21 = vector.shape_cast %20 : vector<128xf32> to vector<1x128xf32>
    %c0_13 = arith.constant 0 : index
    %22 = memref.load %arg5[%c0_13] : memref<1xf32, #tpu.memory_space<smem>>
    %23 = vector.broadcast %22 : f32 to vector<1x128xf32>
    %24 = arith.addf %21, %23 : vector<1x128xf32>
    %c0_14 = arith.constant 0 : index
    %c0_15 = arith.constant 0 : index
    %25 = vector.load %arg6[%c0_14, %c0_15] : memref<1x128xf32, #tpu.memory_space<vmem>>, vector<1x128xf32>
    tpu.vector_store %arg6[%c0_14, %c0_15], %24 {strides = array<i32>} : memref<1x128xf32, #tpu.memory_space<vmem>>, vector<1x128xf32>,
    return
  }
  func.func @transform_0(%arg0: i32) -> (i32, i32) {
    %c0_i32 = arith.constant 0 : i32
    %c0_i32_0 = arith.constant 0 : i32
    return %arg0, %c0_i32 : i32, i32
  }
  func.func @transform_1(%arg0: i32) -> (i32, i32) {
    %c0_i32 = arith.constant 0 : i32
    %c0_i32_0 = arith.constant 0 : i32
    %c0_i32_1 = arith.constant 0 : i32
    return %c0_i32, %c0_i32_0 : i32, i32
  }
  func.func @transform_2(%arg0: i32) -> (i32, i32) {
    %c0_i32 = arith.constant 0 : i32
    %c0_i32_0 = arith.constant 0 : i32
    %c0_i32_1 = arith.constant 0 : i32
    return %c0_i32, %c0_i32_0 : i32, i32
  }
  func.func @transform_3(%arg0: i32) -> (i32, i32) {
    %c0_i32 = arith.constant 0 : i32
    %c0_i32_0 = arith.constant 0 : i32
    %c0_i32_1 = arith.constant 0 : i32
    return %c0_i32, %c0_i32_0 : i32, i32
  }
  func.func @transform_4(%arg0: i32) -> i32 {
    %c0_i32 = arith.constant 0 : i32
    %c0_i32_0 = arith.constant 0 : i32
    return %c0_i32 : i32
  }
  func.func @transform_5(%arg0: i32) -> (i32, i32) {
    %c0_i32 = arith.constant 0 : i32
    %c0_i32_0 = arith.constant 0 : i32
    return %c0_i32, %arg0 : i32, i32
  }
}

</mosaic_0001>

<llo_original>
// kernel: tpu_custom_call.1
$region0: #{tpu_custom_call.1}
  #allocation0 [shape = 'u32[]', space=smem, size = 0x4, offset = 0x4, fixed_abs, tag = 'smem constant byte address 0x4 - core index']
  #allocation1 [shape = 'u32[72,128]{1,0:T(1,128)}', space=vmem, size = 0x9000, scoped, tag = 'internal scratch']
  #allocation2 [shape = 'f32[1]{0:T(128)S(6)}', space=smem, size = 0x200, scoped, tag = 'scoped memory for tpu_custom_call.1']
  %s0 = inlined_call_operand.hbm [shape: f32[512,128], index: 0, kind: input, shape index: {}]
  %s1 = inlined_call_operand.vmem [shape: bf16[128,128], index: 1, kind: input, shape index: {}]
  %s2 = inlined_call_operand.vmem [shape: bf16[128,128], index: 2, kind: input, shape index: {}]
  %s3 = inlined_call_operand.vmem [shape: f32[128,3], index: 3, kind: input, shape index: {}]
  %s4 = inlined_call_operand.<no memory space> [shape: f32[1], index: 4, kind: input, shape index: {}]
  %s5 = inlined_call_operand.hbm [shape: f32[1,512], index: 5, kind: output, shape index: {}]
  %s6 = sld [smem:[#allocation0]]
  $region57: #{tpu_custom_call.1} parent=0
    _
  %s8 = ssub.s32 1, %s6
  %s9 = scalar_select 0, %s8, %s6
  %10 = sst [smem:[#allocation2]] %s4
  $region1: #{tpu_custom_call.1} parent=0
    #allocation3 [shape = 'u8[131072]{0}', space=vmem, size = 0x20000, scoped, tag = 'input window, operand 0']
    #allocation4 [shape = 's32[2]{0}', space=sflag, size = 0x8, scoped, tag = 'scoped memory for tpu_custom_call.1']
    #allocation5 [shape = 's32[2]{0}', space=sflag, size = 0x8, scoped, tag = 'scoped memory for tpu_custom_call.1']
    #allocation6 [shape = 'u8[1024]{0}', space=vmem, size = 0x400, scoped, tag = 'output window, operand 0']
    %11 = vsyncpa [#allocation4], 0
    %s12 = scalar_lea.sflag [#allocation4], 1
    %13 = vsyncpa %s12, 0
    %14 = vsyncpa [#allocation5], 0
    %s15 = scalar_lea.sflag [#allocation5], 1
    %16 = vsyncpa %s15, 0
    loop: start=0, step=1, limit=6
    $region2: #{tpu_custom_call.1} parent=1 // loop_pre_header
      _
    $region3: #{tpu_custom_call.1} parent=1 // loop_header
      %s18 = sphi 0, %s22
      %p19 = scmp.ge.s32.totalorder %s18, 6
      %s28 = sphi 0, %s30
      %s31 = sphi 0, %s28
      %s32 = sphi 0, %s31
      %s48 = sphi 0, %s32
      %s52 = sphi 0, %s52
      %s54 = sphi 0, %s52
      %s55 = sphi 0, %s54
      %s69 = sphi 0, %s55
      %s73 = sphi 0, %s73
      %s75 = sphi 0, %s73
      %s76 = sphi 0, %s75
      %s90 = sphi 0, %s76
      %s94 = sphi 0, %s94
      %s96 = sphi 0, %s94
      %s97 = sphi 0, %s96
      %s111 = sphi 0, %s97
      %s115 = sphi 0, %s115
      %s117 = sphi 0, %s115
      %s118 = sphi 0, %s117
      %s132 = sphi 0, %s118
      %s138 = sphi 0, %s140
      %s141 = sphi 0, %s138
      %s142 = sphi 0, %s141
      %s158 = sphi 0, %s142
    $region4: #{tpu_custom_call.1} parent=1 // loop_header_branch
      %21 = sbr.rel (%p19) target = $region8
    $region5: #{tpu_custom_call.1} parent=1 // loop_body
      %s23 = ssub.s32 %s18, 1
      %s24 = ssub.s32 %s18, 2
      %s25 = sadd.s32 %s18, 1
      %s26 = ssub.s32 %s18, %s25
      %p27 = scmp.eq.s32.totalorder %s26, 0
      %s29 = sadd.s32 %s28, 1
      %s30 = scalar_select %p27, %s28, %s29
      %p33 = pneg %p27
      %p34 = scmp.eq.s32.totalorder %s18, 3
      %p35 = por %p33, %p34
      %p36 = scmp.ne.s32.totalorder %s28, %s31
      %p37 = scmp.eq.s32.totalorder %s18, 0
      %p38 = por %p36, %p37
      %p39 = scmp.ne.s32.totalorder %s28, %s31
      %p40 = scmp.eq.s32.totalorder %s23, 3
      %p41 = por %p39, %p40
      %p42 = scmp.ne.s32.totalorder %s31, %s32
      %p43 = scmp.eq.s32.totalorder %s23, 0
      %p44 = por %p42, %p43
      %p45 = scmp.ne.s32.totalorder %s31, %s32
      %p46 = scmp.eq.s32.totalorder %s24, 3
      %p47 = por %p45, %p46
      %p49 = scmp.ne.s32.totalorder %s32, %s48
      %p50 = scmp.eq.s32.totalorder %s24, 0
      %p51 = por %p49, %p50
      %s53 = sadd.s32 %s52, 1
      %p56 = scmp.eq.s32.totalorder %s18, 3
      %p57 = scmp.ne.s32.totalorder %s52, %s54
      %p58 = scmp.eq.s32.totalorder %s18, 0
      %p59 = por %p57, %p58
      %p60 = scmp.ne.s32.totalorder %s52, %s54
      %p61 = scmp.eq.s32.totalorder %s23, 3
      %p62 = por %p60, %p61
      %p63 = scmp.ne.s32.totalorder %s54, %s55
      %p64 = scmp.eq.s32.totalorder %s23, 0
      %p65 = por %p63, %p64
      %p66 = scmp.ne.s32.totalorder %s54, %s55
      %p67 = scmp.eq.s32.totalorder %s24, 3
      %p68 = por %p66, %p67
      %p70 = scmp.ne.s32.totalorder %s55, %s69
      %p71 = scmp.eq.s32.totalorder %s24, 0
      %p72 = por %p70, %p71
      %s74 = sadd.s32 %s73, 1
      %p77 = scmp.eq.s32.totalorder %s18, 3
      %p78 = scmp.ne.s32.totalorder %s73, %s75
      %p79 = scmp.eq.s32.totalorder %s18, 0
      %p80 = por %p78, %p79
      %p81 = scmp.ne.s32.totalorder %s73, %s75
      %p82 = scmp.eq.s32.totalorder %s23, 3
      %p83 = por %p81, %p82
      %p84 = scmp.ne.s32.totalorder %s75, %s76
      %p85 = scmp.eq.s32.totalorder %s23, 0
      %p86 = por %p84, %p85
      %p87 = scmp.ne.s32.totalorder %s75, %s76
      %p88 = scmp.eq.s32.totalorder %s24, 3
      %p89 = por %p87, %p88
      %p91 = scmp.ne.s32.totalorder %s76, %s90
      %p92 = scmp.eq.s32.totalorder %s24, 0
      %p93 = por %p91, %p92
      %s95 = sadd.s32 %s94, 1
      %p98 = scmp.eq.s32.totalorder %s18, 3
      %p99 = scmp.ne.s32.totalorder %s94, %s96
      %p100 = scmp.eq.s32.totalorder %s18, 0
      %p101 = por %p99, %p100
      %p102 = scmp.ne.s32.totalorder %s94, %s96
      %p103 = scmp.eq.s32.totalorder %s23, 3
      %p104 = por %p102, %p103
      %p105 = scmp.ne.s32.totalorder %s96, %s97
      %p106 = scmp.eq.s32.totalorder %s23, 0
      %p107 = por %p105, %p106
      %p108 = scmp.ne.s32.totalorder %s96, %s97
      %p109 = scmp.eq.s32.totalorder %s24, 3
      %p110 = por %p108, %p109
      %p112 = scmp.ne.s32.totalorder %s97, %s111
      %p113 = scmp.eq.s32.totalorder %s24, 0
      %p114 = por %p112, %p113
      %s116 = sadd.s32 %s115, 1
      %p119 = scmp.eq.s32.totalorder %s18, 3
      %p120 = scmp.ne.s32.totalorder %s115, %s117
      %p121 = scmp.eq.s32.totalorder %s18, 0
      %p122 = por %p120, %p121
      %p123 = scmp.ne.s32.totalorder %s115, %s117
      %p124 = scmp.eq.s32.totalorder %s23, 3
      %p125 = por %p123, %p124
      %p126 = scmp.ne.s32.totalorder %s117, %s118
      %p127 = scmp.eq.s32.totalorder %s23, 0
      %p128 = por %p126, %p127
      %p129 = scmp.ne.s32.totalorder %s117, %s118
      %p130 = scmp.eq.s32.totalorder %s24, 3
      %p131 = por %p129, %p130
      %p133 = scmp.ne.s32.totalorder %s118, %s132
      %p134 = scmp.eq.s32.totalorder %s24, 0
      %p135 = por %p133, %p134
      %s136 = ssub.s32 %s18, %s25
      %p137 = scmp.eq.s32.totalorder %s136, 0
      %s139 = sadd.s32 %s138, 1
      %s140 = scalar_select %p137, %s138, %s139
      %p143 = pneg %p137
      %p144 = scmp.eq.s32.totalorder %s18, 3
      %p145 = por %p143, %p144
      %p146 = scmp.ne.s32.totalorder %s138, %s141
      %p147 = scmp.eq.s32.totalorder %s18, 0
      %p148 = por %p146, %p147
      %p149 = scmp.ne.s32.totalorder %s138, %s141
      %p150 = scmp.eq.s32.totalorder %s23, 3
      %p151 = por %p149, %p150
      %p152 = scmp.ne.s32.totalorder %s141, %s142
      %p153 = scmp.eq.s32.totalorder %s23, 0
      %p154 = por %p152, %p153
      %p155 = scmp.ne.s32.totalorder %s141, %s142
      %p156 = scmp.eq.s32.totalorder %s24, 3
      %p157 = por %p155, %p156
      %p159 = scmp.ne.s32.totalorder %s142, %s158
      %p160 = scmp.eq.s32.totalorder %s24, 0
      %p161 = por %p159, %p160
      %p162 = scmp.le.s32.totalorder 1, %s18
      %p163 = scmp.lt.s32.totalorder %s18, 5
      %p164 = pnand %p162, %p163
      %p165 = pneg %p164
      // Predicated region
      $region9: #{tpu_custom_call.1} parent=5 // pred_check
        _
      $region10: #{tpu_custom_call.1} parent=5 // pred_check_branch
        %167 = sbr.rel (%p164) target = $region12
      $region11: #{tpu_custom_call.1} parent=5 // pred_region
        %s168 = ssub.s32 %s18, 1
        // Predicated region
        $region13: #{tpu_custom_call.1} parent=11 // pred_check
          %p169 = pneg %p65
        $region14: #{tpu_custom_call.1} parent=11 // pred_check_branch
          %171 = sbr.rel (%p169) target = $region16
        $region15: #{tpu_custom_call.1} parent=11 // pred_region
          _
        $region16: #{tpu_custom_call.1} parent=11 // pred_fallthru
          _
        // Predicated region
        $region17: #{tpu_custom_call.1} parent=11 // pred_check
          %p172 = pneg %p86
        $region18: #{tpu_custom_call.1} parent=11 // pred_check_branch
          %174 = sbr.rel (%p172) target = $region20
        $region19: #{tpu_custom_call.1} parent=11 // pred_region
          _
        $region20: #{tpu_custom_call.1} parent=11 // pred_fallthru
          _
        // Predicated region
        $region21: #{tpu_custom_call.1} parent=11 // pred_check
          %p175 = pneg %p107
        $region22: #{tpu_custom_call.1} parent=11 // pred_check_branch
          %177 = sbr.rel (%p175) target = $region24
        $region23: #{tpu_custom_call.1} parent=11 // pred_region
          _
        $region24: #{tpu_custom_call.1} parent=11 // pred_fallthru
          _
        // Predicated region
        $region25: #{tpu_custom_call.1} parent=11 // pred_check
          %p178 = pneg %p128
        $region26: #{tpu_custom_call.1} parent=11 // pred_check_branch
          %180 = sbr.rel (%p178) target = $region28
        $region27: #{tpu_custom_call.1} parent=11 // pred_region
          _
        $region28: #{tpu_custom_call.1} parent=11 // pred_fallthru
          _
      $region12: #{tpu_custom_call.1} parent=5 // pred_fallthru
        _
      %p181 = scmp.lt.s32.totalorder %s18, 4
      // Predicated region
      $region29: #{tpu_custom_call.1} parent=5 // pred_check
        %p182 = pneg %p181
      $region30: #{tpu_custom_call.1} parent=5 // pred_check_branch
        %184 = sbr.rel (%p182) target = $region32
      $region31: #{tpu_custom_call.1} parent=5 // pred_region
        // Predicated region
        $region33: #{tpu_custom_call.1} parent=31 // pred_check
          %p185 = pneg %p38
        $region34: #{tpu_custom_call.1} parent=31 // pred_check_branch
          %187 = sbr.rel (%p185) target = $region36
        $region35: #{tpu_custom_call.1} parent=31 // pred_region
          %s188 = sand.u32 %s28, 1
          %s189 = scalar_lea.sflag [#allocation4], %s188
          %s190 = sand.u32 %s28, 1
          %s191 = smul.addr %s190, 128
          %s192 = scalar_lea.vmem [#allocation3], %s191
          %s193 = smul.u32 16, %s18
          %195 = vsyncadd %s189, 0
          %s196 = smul.addr %s193, 8
          %s197 = scalar_lea.hbm %s0, %s196
          %s198 = sshll.u32 %s197, 4
          %s199 = int_to_ptr.hbm [resolvable:$true] %s198
          %s200 = sshll.u32 %s192, 4
          %s201 = int_to_ptr.vmem [resolvable:$true] %s200
          %206 = dma.hbm_to_vmem [thread:$0]  %s199, 2048, %s201, %s189, 128, 128, 8
        $region36: #{tpu_custom_call.1} parent=31 // pred_fallthru
          _
      $region32: #{tpu_custom_call.1} parent=5 // pred_fallthru
        _
      %p207 = scmp.le.s32.totalorder 1, %s18
      %p208 = scmp.lt.s32.totalorder %s18, 5
      %p209 = pnand %p207, %p208
      %p210 = pneg %p209
      // Predicated region
      $region37: #{tpu_custom_call.1} parent=5 // pred_check
        _
      $region38: #{tpu_custom_call.1} parent=5 // pred_check_branch
        %212 = sbr.rel (%p209) target = $region40
      $region39: #{tpu_custom_call.1} parent=5 // pred_region
        %s213 = ssub.s32 %s18, 1
        %s214 = sand.u32 %s31, 1
        %s215 = scalar_lea.sflag [#allocation4], %s214
        %s216 = sand.u32 %s31, 1
        %s217 = smul.addr %s216, 128
        %s218 = scalar_lea.vmem [#allocation3], %s217
        // Predicated region
        $region41: #{tpu_custom_call.1} parent=39 // pred_check
          %p219 = pneg %p44
        $region42: #{tpu_custom_call.1} parent=39 // pred_check_branch
          %221 = sbr.rel (%p219) target = $region44
        $region43: #{tpu_custom_call.1} parent=39 // pred_region
          %223 = dma.done %s215, 2048
        $region44: #{tpu_custom_call.1} parent=39 // pred_fallthru
          _
        %s224 = sand.u32 %s31, 1
        %s225 = scalar_lea.sflag [#allocation4], %s224
        %s226 = sand.u32 %s31, 1
        %s227 = smul.addr %s226, 128
        %s228 = scalar_lea.vmem [#allocation3], %s227
        %p229 = pneg %p44
        %p230 = pneg %p41
        %p231 = pneg %p65
        %p232 = pneg %p62
        %p233 = pneg %p86
        %p234 = pneg %p83
        %p235 = pneg %p107
        %p236 = pneg %p104
        %p237 = pneg %p128
        %p238 = pneg %p125
        %p239 = pneg %p154
        %p240 = pneg %p151
        %s241 = sand.u32 %s141, 1
        %s242 = scalar_lea.sflag [#allocation5], %s241
        %s243 = sand.u32 %s141, 1
        %s244 = scalar_lea.vmem [#allocation6], %s243
        %s245 = smul.u32 16, %s23
        %v246 = vld [vmem:[%s218] sm:$0xff]
        %v247 = vld [vmem:[%s218 + $0x8] sm:$0xff]
        %v248 = vld [vmem:[%s218 + $0x10] sm:$0xff]
        %v249 = vld [vmem:[%s218 + $0x18] sm:$0xff]
        %v250 = vld [vmem:[%s218 + $0x20] sm:$0xff]
        %v251 = vld [vmem:[%s218 + $0x28] sm:$0xff]
        %v252 = vld [vmem:[%s218 + $0x30] sm:$0xff]
        %v253 = vld [vmem:[%s218 + $0x38] sm:$0xff]
        %v254 = vld [vmem:[%s218 + $0x40] sm:$0xff]
        %v255 = vld [vmem:[%s218 + $0x48] sm:$0xff]
        %v256 = vld [vmem:[%s218 + $0x50] sm:$0xff]
        %v257 = vld [vmem:[%s218 + $0x58] sm:$0xff]
        %v258 = vld [vmem:[%s218 + $0x60] sm:$0xff]
        %v259 = vld [vmem:[%s218 + $0x68] sm:$0xff]
        %v260 = vld [vmem:[%s218 + $0x70] sm:$0xff]
        %v261 = vld [vmem:[%s218 + $0x78] sm:$0xff]
        %v262 = vpack.c.bf16 %v247, %v246
        %v263 = vpack.c.bf16 %v249, %v248
        %v264 = vpack.c.bf16 %v251, %v250
        %v265 = vpack.c.bf16 %v253, %v252
        %v266 = vpack.c.bf16 %v255, %v254
        %v267 = vpack.c.bf16 %v257, %v256
        %v268 = vpack.c.bf16 %v259, %v258
        %v269 = vpack.c.bf16 %v261, %v260
        %v270 = vld [vmem:[%s3] sm:$0xff]
        %v271 = vld [vmem:[%s3 + $0x8] sm:$0xff]
        %v272 = vld [vmem:[%s3 + $0x10] sm:$0xff]
        %v273 = vld [vmem:[%s3 + $0x18] sm:$0xff]
        %v274 = vld [vmem:[%s3 + $0x20] sm:$0xff]
        %v275 = vld [vmem:[%s3 + $0x28] sm:$0xff]
        %v276 = vld [vmem:[%s3 + $0x30] sm:$0xff]
        %v277 = vld [vmem:[%s3 + $0x38] sm:$0xff]
        %v278 = vld [vmem:[%s3 + $0x40] sm:$0xff]
        %v279 = vld [vmem:[%s3 + $0x48] sm:$0xff]
        %v280 = vld [vmem:[%s3 + $0x50] sm:$0xff]
        %v281 = vld [vmem:[%s3 + $0x58] sm:$0xff]
        %v282 = vld [vmem:[%s3 + $0x60] sm:$0xff]
        %v283 = vld [vmem:[%s3 + $0x68] sm:$0xff]
        %v284 = vld [vmem:[%s3 + $0x70] sm:$0xff]
        %v285 = vld [vmem:[%s3 + $0x78] sm:$0xff]
        %v286 = vld [vmem:[%s1] sm:$0xf]
        %v287 = vld [vmem:[%s1 + $0x4] sm:$0xf]
        %v288 = vld [vmem:[%s1 + $0x8] sm:$0xf]
        %v289 = vld [vmem:[%s1 + $0xc] sm:$0xf]
        %v290 = vld [vmem:[%s1 + $0x10] sm:$0xf]
        %v291 = vld [vmem:[%s1 + $0x14] sm:$0xf]
        %v292 = vld [vmem:[%s1 + $0x18] sm:$0xf]
        %v293 = vld [vmem:[%s1 + $0x1c] sm:$0xf]
        %v294 = vld [vmem:[%s1 + $0x20] sm:$0xf]
        %v295 = vld [vmem:[%s1 + $0x24] sm:$0xf]
        %v296 = vld [vmem:[%s1 + $0x28] sm:$0xf]
        %v297 = vld [vmem:[%s1 + $0x2c] sm:$0xf]
        %v298 = vld [vmem:[%s1 + $0x30] sm:$0xf]
        %v299 = vld [vmem:[%s1 + $0x34] sm:$0xf]
        %v300 = vld [vmem:[%s1 + $0x38] sm:$0xf]
        %v301 = vld [vmem:[%s1 + $0x3c] sm:$0xf]
        %303 = vset.pattern.permute.xlu0 0
        %304 = vperm.xlu0 %303, %v270
        %v305 = vpop.permute.xlu0 %304
        %308 = vset.pattern.permute.xlu0 0
        %309 = vperm.xlu0 %308, %v271
        %v310 = vpop.permute.xlu0 %309
        %313 = vset.pattern.permute.xlu0 0
        %314 = vperm.xlu0 %313, %v272
        %v315 = vpop.permute.xlu0 %314
        %318 = vset.pattern.permute.xlu0 0
        %319 = vperm.xlu0 %318, %v273
        %v320 = vpop.permute.xlu0 %319
        %323 = vset.pattern.permute.xlu0 0
        %324 = vperm.xlu0 %323, %v274
        %v325 = vpop.permute.xlu0 %324
        %328 = vset.pattern.permute.xlu0 0
        %329 = vperm.xlu0 %328, %v275
        %v330 = vpop.permute.xlu0 %329
        %333 = vset.pattern.permute.xlu0 0
        %334 = vperm.xlu0 %333, %v276
        %v335 = vpop.permute.xlu0 %334
        %338 = vset.pattern.permute.xlu0 0
        %339 = vperm.xlu0 %338, %v277
        %v340 = vpop.permute.xlu0 %339
        %343 = vset.pattern.permute.xlu0 0
        %344 = vperm.xlu0 %343, %v278
        %v345 = vpop.permute.xlu0 %344
        %348 = vset.pattern.permute.xlu0 0
        %349 = vperm.xlu0 %348, %v279
        %v350 = vpop.permute.xlu0 %349
        %353 = vset.pattern.permute.xlu0 0
        %354 = vperm.xlu0 %353, %v280
        %v355 = vpop.permute.xlu0 %354
        %358 = vset.pattern.permute.xlu0 0
        %359 = vperm.xlu0 %358, %v281
        %v360 = vpop.permute.xlu0 %359
        %363 = vset.pattern.permute.xlu0 0
        %364 = vperm.xlu0 %363, %v282
        %v365 = vpop.permute.xlu0 %364
        %368 = vset.pattern.permute.xlu0 0
        %369 = vperm.xlu0 %368, %v283
        %v370 = vpop.permute.xlu0 %369
        %373 = vset.pattern.permute.xlu0 0
        %374 = vperm.xlu0 %373, %v284
        %v375 = vpop.permute.xlu0 %374
        %378 = vset.pattern.permute.xlu0 0
        %379 = vperm.xlu0 %378, %v285
        %v380 = vpop.permute.xlu0 %379
        %v398 = vunpack.c.l.b16 %v286
        %v399 = vunpack.c.l.b16 %v287
        %v400 = vunpack.c.l.b16 %v288
        %v401 = vunpack.c.l.b16 %v289
        %v402 = vunpack.c.l.b16 %v290
        %v403 = vunpack.c.l.b16 %v291
        %v404 = vunpack.c.l.b16 %v292
        %v405 = vunpack.c.l.b16 %v293
        %v406 = vunpack.c.l.b16 %v294
        %v407 = vunpack.c.l.b16 %v295
        %v408 = vunpack.c.l.b16 %v296
        %v409 = vunpack.c.l.b16 %v297
        %v410 = vunpack.c.l.b16 %v298
        %v411 = vunpack.c.l.b16 %v299
        %v412 = vunpack.c.l.b16 %v300
        %v413 = vunpack.c.l.b16 %v301
        %v414 = vpack.c.b16 %v399, %v398
        %v415 = vpack.c.b16 %v401, %v400
        %v416 = vpack.c.b16 %v403, %v402
        %v417 = vpack.c.b16 %v405, %v404
        %v418 = vpack.c.b16 %v407, %v406
        %v419 = vpack.c.b16 %v409, %v408
        %v420 = vpack.c.b16 %v411, %v410
        %v421 = vpack.c.b16 %v413, %v412
        %430 = vmatpush.bf16.xpose.msra.mxu0 %v269
        %431 = vmatpush.bf16.xpose.msra.mxu0 %v268
        %432 = vmatpush.bf16.xpose.msra.mxu0 %v267
        %433 = vmatpush.bf16.xpose.msra.mxu0 %v266
        %434 = vmatpush.bf16.xpose.msra.mxu0 %v265
        %435 = vmatpush.bf16.xpose.msra.mxu0 %v264
        %436 = vmatpush.bf16.xpose.msra.mxu0 %v263
        %437 = vmatpush.bf16.xpose.msra.mxu0 %v262
        %438 = vmatmul.bf16.gmra.mxu0 %v414
        %v439 = vpop.f32.mrf.mxu0
        %v440 = vadd.f32 %v305, %v439
        %v441 = vpop.f32.mrf.mxu0
        %v442 = vadd.f32 %v310, %v441
        %443 = vmatmul.bf16.gmra.mxu0 %v415
        %v444 = vpop.f32.mrf.mxu0
        %v445 = vadd.f32 %v315, %v444
        %v446 = vpop.f32.mrf.mxu0
        %v447 = vadd.f32 %v320, %v446
        %448 = vmatmul.bf16.gmra.mxu0 %v416
        %v449 = vpop.f32.mrf.mxu0
        %v450 = vadd.f32 %v325, %v449
        %v451 = vpop.f32.mrf.mxu0
        %v452 = vadd.f32 %v330, %v451
        %453 = vmatmul.bf16.gmra.mxu0 %v417
        %v454 = vpop.f32.mrf.mxu0
        %v455 = vadd.f32 %v335, %v454
        %v456 = vpop.f32.mrf.mxu0
        %v457 = vadd.f32 %v340, %v456
        %458 = vmatmul.bf16.gmra.mxu0 %v418
        %v459 = vpop.f32.mrf.mxu0
        %v460 = vadd.f32 %v345, %v459
        %v461 = vpop.f32.mrf.mxu0
        %v462 = vadd.f32 %v350, %v461
        %463 = vmatmul.bf16.gmra.mxu0 %v419
        %v464 = vpop.f32.mrf.mxu0
        %v465 = vadd.f32 %v355, %v464
        %v466 = vpop.f32.mrf.mxu0
        %v467 = vadd.f32 %v360, %v466
        %468 = vmatmul.bf16.gmra.mxu0 %v420
        %v469 = vpop.f32.mrf.mxu0
        %v470 = vadd.f32 %v365, %v469
        %v471 = vpop.f32.mrf.mxu0
        %v472 = vadd.f32 %v370, %v471
        %473 = vmatmul.bf16.gmra.mxu0 %v421
        %v474 = vpop.f32.mrf.mxu0
        %v475 = vadd.f32 %v375, %v474
        %v476 = vpop.f32.mrf.mxu0
        %v477 = vadd.f32 %v380, %v476
        %478 = vdwg.mxu0
        %v479 = vmax.f32 %v440, 0.0
        %v480 = vmax.f32 %v442, 0.0
        %v481 = vmax.f32 %v445, 0.0
        %v482 = vmax.f32 %v447, 0.0
        %v483 = vmax.f32 %v450, 0.0
        %v484 = vmax.f32 %v452, 0.0
        %v485 = vmax.f32 %v455, 0.0
        %v486 = vmax.f32 %v457, 0.0
        %v487 = vmax.f32 %v460, 0.0
        %v488 = vmax.f32 %v462, 0.0
        %v489 = vmax.f32 %v465, 0.0
        %v490 = vmax.f32 %v467, 0.0
        %v491 = vmax.f32 %v470, 0.0
        %v492 = vmax.f32 %v472, 0.0
        %v493 = vmax.f32 %v475, 0.0
        %v494 = vmax.f32 %v477, 0.0
        %v495 = vld [vmem:[%s2] sm:$0xf]
        %v496 = vld [vmem:[%s2 + $0x4] sm:$0xf]
        %v497 = vld [vmem:[%s2 + $0x8] sm:$0xf]
        %v498 = vld [vmem:[%s2 + $0xc] sm:$0xf]
        %v499 = vld [vmem:[%s2 + $0x10] sm:$0xf]
        %v500 = vld [vmem:[%s2 + $0x14] sm:$0xf]
        %v501 = vld [vmem:[%s2 + $0x18] sm:$0xf]
        %v502 = vld [vmem:[%s2 + $0x1c] sm:$0xf]
        %v503 = vld [vmem:[%s2 + $0x20] sm:$0xf]
        %v504 = vld [vmem:[%s2 + $0x24] sm:$0xf]
        %v505 = vld [vmem:[%s2 + $0x28] sm:$0xf]
        %v506 = vld [vmem:[%s2 + $0x2c] sm:$0xf]
        %v507 = vld [vmem:[%s2 + $0x30] sm:$0xf]
        %v508 = vld [vmem:[%s2 + $0x34] sm:$0xf]
        %v509 = vld [vmem:[%s2 + $0x38] sm:$0xf]
        %v510 = vld [vmem:[%s2 + $0x3c] sm:$0xf]
        %v511 = vpack.c.bf16 %v480, %v479
        %v512 = vpack.c.bf16 %v482, %v481
        %v513 = vpack.c.bf16 %v484, %v483
        %v514 = vpack.c.bf16 %v486, %v485
        %v515 = vpack.c.bf16 %v488, %v487
        %v516 = vpack.c.bf16 %v490, %v489
        %v517 = vpack.c.bf16 %v492, %v491
        %v518 = vpack.c.bf16 %v494, %v493
        %519 = vset.pattern.permute.xlu0 1
        %520 = vperm.xlu0 %519, %v270
        %v521 = vpop.permute.xlu0 %520
        %523 = vset.pattern.permute.xlu0 1
        %524 = vperm.xlu0 %523, %v271
        %v525 = vpop.permute.xlu0 %524
        %527 = vset.pattern.permute.xlu0 1
        %528 = vperm.xlu0 %527, %v272
        %v529 = vpop.permute.xlu0 %528
        %531 = vset.pattern.permute.xlu0 1
        %532 = vperm.xlu0 %531, %v273
        %v533 = vpop.permute.xlu0 %532
        %535 = vset.pattern.permute.xlu0 1
        %536 = vperm.xlu0 %535, %v274
        %v537 = vpop.permute.xlu0 %536
        %539 = vset.pattern.permute.xlu0 1
        %540 = vperm.xlu0 %539, %v275
        %v541 = vpop.permute.xlu0 %540
        %543 = vset.pattern.permute.xlu0 1
        %544 = vperm.xlu0 %543, %v276
        %v545 = vpop.permute.xlu0 %544
        %547 = vset.pattern.permute.xlu0 1
        %548 = vperm.xlu0 %547, %v277
        %v549 = vpop.permute.xlu0 %548
        %551 = vset.pattern.permute.xlu0 1
        %552 = vperm.xlu0 %551, %v278
        %v553 = vpop.permute.xlu0 %552
        %555 = vset.pattern.permute.xlu0 1
        %556 = vperm.xlu0 %555, %v279
        %v557 = vpop.permute.xlu0 %556
        %559 = vset.pattern.permute.xlu0 1
        %560 = vperm.xlu0 %559, %v280
        %v561 = vpop.permute.xlu0 %560
        %563 = vset.pattern.permute.xlu0 1
        %564 = vperm.xlu0 %563, %v281
        %v565 = vpop.permute.xlu0 %564
        %567 = vset.pattern.permute.xlu0 1
        %568 = vperm.xlu0 %567, %v282
        %v569 = vpop.permute.xlu0 %568
        %571 = vset.pattern.permute.xlu0 1
        %572 = vperm.xlu0 %571, %v283
        %v573 = vpop.permute.xlu0 %572
        %575 = vset.pattern.permute.xlu0 1
        %576 = vperm.xlu0 %575, %v284
        %v577 = vpop.permute.xlu0 %576
        %579 = vset.pattern.permute.xlu0 1
        %580 = vperm.xlu0 %579, %v285
        %v581 = vpop.permute.xlu0 %580
        %v599 = vunpack.c.l.b16 %v495
        %v600 = vunpack.c.l.b16 %v496
        %v601 = vunpack.c.l.b16 %v497
        %v602 = vunpack.c.l.b16 %v498
        %v603 = vunpack.c.l.b16 %v499
        %v604 = vunpack.c.l.b16 %v500
        %v605 = vunpack.c.l.b16 %v501
        %v606 = vunpack.c.l.b16 %v502
        %v607 = vunpack.c.l.b16 %v503
        %v608 = vunpack.c.l.b16 %v504
        %v609 = vunpack.c.l.b16 %v505
        %v610 = vunpack.c.l.b16 %v506
        %v611 = vunpack.c.l.b16 %v507
        %v612 = vunpack.c.l.b16 %v508
        %v613 = vunpack.c.l.b16 %v509
        %v614 = vunpack.c.l.b16 %v510
        %v615 = vpack.c.b16 %v600, %v599
        %v616 = vpack.c.b16 %v602, %v601
        %v617 = vpack.c.b16 %v604, %v603
        %v618 = vpack.c.b16 %v606, %v605
        %v619 = vpack.c.b16 %v608, %v607
        %v620 = vpack.c.b16 %v610, %v609
        %v621 = vpack.c.b16 %v612, %v611
        %v622 = vpack.c.b16 %v614, %v613
        %631 = vmatpush.bf16.msra.mxu0 %v518
        %632 = vmatpush.bf16.msra.mxu0 %v517
        %633 = vmatpush.bf16.msra.mxu0 %v516
        %634 = vmatpush.bf16.msra.mxu0 %v515
        %635 = vmatpush.bf16.msra.mxu0 %v514
        %636 = vmatpush.bf16.msra.mxu0 %v513
        %637 = vmatpush.bf16.msra.mxu0 %v512
        %638 = vmatpush.bf16.msra.mxu0 %v511
        %639 = vmatmul.bf16.gmra.mxu0 %v615
        %v640 = vpop.f32.mrf.mxu0
        %v641 = vadd.f32 %v521, %v640
        %v642 = vpop.f32.mrf.mxu0
        %v643 = vadd.f32 %v525, %v642
        %644 = vmatmul.bf16.gmra.mxu0 %v616
        %v645 = vpop.f32.mrf.mxu0
        %v646 = vadd.f32 %v529, %v645
        %v647 = vpop.f32.mrf.mxu0
        %v648 = vadd.f32 %v533, %v647
        %649 = vmatmul.bf16.gmra.mxu0 %v617
        %v650 = vpop.f32.mrf.mxu0
        %v651 = vadd.f32 %v537, %v650
        %v652 = vpop.f32.mrf.mxu0
        %v653 = vadd.f32 %v541, %v652
        %654 = vmatmul.bf16.gmra.mxu0 %v618
        %v655 = vpop.f32.mrf.mxu0
        %v656 = vadd.f32 %v545, %v655
        %v657 = vpop.f32.mrf.mxu0
        %v658 = vadd.f32 %v549, %v657
        %659 = vmatmul.bf16.gmra.mxu0 %v619
        %v660 = vpop.f32.mrf.mxu0
        %v661 = vadd.f32 %v553, %v660
        %v662 = vpop.f32.mrf.mxu0
        %v663 = vadd.f32 %v557, %v662
        %664 = vmatmul.bf16.gmra.mxu0 %v620
        %v665 = vpop.f32.mrf.mxu0
        %v666 = vadd.f32 %v561, %v665
        %v667 = vpop.f32.mrf.mxu0
        %v668 = vadd.f32 %v565, %v667
        %669 = vmatmul.bf16.gmra.mxu0 %v621
        %v670 = vpop.f32.mrf.mxu0
        %v671 = vadd.f32 %v569, %v670
        %v672 = vpop.f32.mrf.mxu0
        %v673 = vadd.f32 %v573, %v672
        %674 = vmatmul.bf16.gmra.mxu0 %v622
        %v675 = vpop.f32.mrf.mxu0
        %v676 = vadd.f32 %v577, %v675
        %v677 = vpop.f32.mrf.mxu0
        %v678 = vadd.f32 %v581, %v677
        %679 = vdwg.mxu0
        %v680 = vmax.f32 %v641, 0.0
        %v681 = vmax.f32 %v643, 0.0
        %v682 = vmax.f32 %v646, 0.0
        %v683 = vmax.f32 %v648, 0.0
        %v684 = vmax.f32 %v651, 0.0
        %v685 = vmax.f32 %v653, 0.0
        %v686 = vmax.f32 %v656, 0.0
        %v687 = vmax.f32 %v658, 0.0
        %v688 = vmax.f32 %v661, 0.0
        %v689 = vmax.f32 %v663, 0.0
        %v690 = vmax.f32 %v666, 0.0
        %v691 = vmax.f32 %v668, 0.0
        %v692 = vmax.f32 %v671, 0.0
        %v693 = vmax.f32 %v673, 0.0
        %v694 = vmax.f32 %v676, 0.0
        %v695 = vmax.f32 %v678, 0.0
        %696 = vset.pattern.permute.xlu0 2
        %697 = vperm.xlu0 %696, %v270
        %v698 = vpop.permute.xlu0 %697
        %700 = vset.pattern.permute.xlu0 2
        %701 = vperm.xlu0 %700, %v271
        %v702 = vpop.permute.xlu0 %701
        %704 = vset.pattern.permute.xlu0 2
        %705 = vperm.xlu0 %704, %v272
        %v706 = vpop.permute.xlu0 %705
        %708 = vset.pattern.permute.xlu0 2
        %709 = vperm.xlu0 %708, %v273
        %v710 = vpop.permute.xlu0 %709
        %712 = vset.pattern.permute.xlu0 2
        %713 = vperm.xlu0 %712, %v274
        %v714 = vpop.permute.xlu0 %713
        %716 = vset.pattern.permute.xlu0 2
        %717 = vperm.xlu0 %716, %v275
        %v718 = vpop.permute.xlu0 %717
        %720 = vset.pattern.permute.xlu0 2
        %721 = vperm.xlu0 %720, %v276
        %v722 = vpop.permute.xlu0 %721
        %724 = vset.pattern.permute.xlu0 2
        %725 = vperm.xlu0 %724, %v277
        %v726 = vpop.permute.xlu0 %725
        %728 = vset.pattern.permute.xlu0 2
        %729 = vperm.xlu0 %728, %v278
        %v730 = vpop.permute.xlu0 %729
        %732 = vset.pattern.permute.xlu0 2
        %733 = vperm.xlu0 %732, %v279
        %v734 = vpop.permute.xlu0 %733
        %736 = vset.pattern.permute.xlu0 2
        %737 = vperm.xlu0 %736, %v280
        %v738 = vpop.permute.xlu0 %737
        %740 = vset.pattern.permute.xlu0 2
        %741 = vperm.xlu0 %740, %v281
        %v742 = vpop.permute.xlu0 %741
        %744 = vset.pattern.permute.xlu0 2
        %745 = vperm.xlu0 %744, %v282
        %v746 = vpop.permute.xlu0 %745
        %748 = vset.pattern.permute.xlu0 2
        %749 = vperm.xlu0 %748, %v283
        %v750 = vpop.permute.xlu0 %749
        %752 = vset.pattern.permute.xlu0 2
        %753 = vperm.xlu0 %752, %v284
        %v754 = vpop.permute.xlu0 %753
        %756 = vset.pattern.permute.xlu0 2
        %757 = vperm.xlu0 %756, %v285
        %v758 = vpop.permute.xlu0 %757
        %v760 = vmul.f32 %v680, %v698
        %v761 = vmul.f32 %v681, %v702
        %v762 = vmul.f32 %v682, %v706
        %v763 = vmul.f32 %v683, %v710
        %v764 = vmul.f32 %v684, %v714
        %v765 = vmul.f32 %v685, %v718
        %v766 = vmul.f32 %v686, %v722
        %v767 = vmul.f32 %v687, %v726
        %v768 = vmul.f32 %v688, %v730
        %v769 = vmul.f32 %v689, %v734
        %v770 = vmul.f32 %v690, %v738
        %v771 = vmul.f32 %v691, %v742
        %v772 = vmul.f32 %v692, %v746
        %v773 = vmul.f32 %v693, %v750
        %v774 = vmul.f32 %v694, %v754
        %v775 = vmul.f32 %v695, %v758
        %v776 = vadd.f32 %v760, %v761
        %v777 = vadd.f32 %v776, %v762
        %v778 = vadd.f32 %v777, %v763
        %v779 = vadd.f32 %v778, %v764
        %v780 = vadd.f32 %v779, %v765
        %v781 = vadd.f32 %v780, %v766
        %v782 = vadd.f32 %v781, %v767
        %v783 = vadd.f32 %v782, %v768
        %v784 = vadd.f32 %v783, %v769
        %v785 = vadd.f32 %v784, %v770
        %v786 = vadd.f32 %v785, %v771
        %v787 = vadd.f32 %v786, %v772
        %v788 = vadd.f32 %v787, %v773
        %v789 = vadd.f32 %v788, %v774
        %v790 = vadd.f32 %v789, %v775
        %v791 = vrot.slane %v790, 4
        %v792 = vadd.f32 %v790, %v791
        %v793 = vrot.slane %v792, 2
        %v794 = vadd.f32 %v792, %v793
        %v795 = vrot.slane %v794, 1
        %v796 = vadd.f32 %v794, %v795
        %s797 = sld [smem:[#allocation2]]
        %v798 = vstv %s797
        %v799 = vadd.f32 %v796, %v798
        %800 = vst [vmem:[%s244] sm:$0x1] %v799
        %s801 = sand.u32 %s141, 1
        %s802 = scalar_lea.sflag [#allocation5], %s801
        %s803 = sand.u32 %s141, 1
        %s804 = scalar_lea.vmem [#allocation6], %s803
        // Predicated region
        $region45: #{tpu_custom_call.1} parent=39 // pred_check
          %p805 = pneg %p151
        $region46: #{tpu_custom_call.1} parent=39 // pred_check_branch
          %807 = sbr.rel (%p805) target = $region48
        $region47: #{tpu_custom_call.1} parent=39 // pred_region
          %809 = vsyncadd %s802, 0
          %s810 = scalar_lea.hbm %s5, %s23
          %s812 = sshll.u32 %s804, 4
          %s813 = int_to_ptr.vmem [resolvable:$true] %s812
          %s814 = sshll.u32 %s810, 4
          %s815 = int_to_ptr.hbm [resolvable:$true] %s814
          %817 = dma.vmem_to_hbm [thread:$0]  %s813, 16, %s815, %s802
        $region48: #{tpu_custom_call.1} parent=39 // pred_fallthru
          _
      $region40: #{tpu_custom_call.1} parent=5 // pred_fallthru
        _
      %p818 = scmp.le.s32.totalorder 2, %s18
      // Predicated region
      $region49: #{tpu_custom_call.1} parent=5 // pred_check
        %p819 = pneg %p818
      $region50: #{tpu_custom_call.1} parent=5 // pred_check_branch
        %821 = sbr.rel (%p819) target = $region52
      $region51: #{tpu_custom_call.1} parent=5 // pred_region
        %s822 = ssub.s32 %s18, 2
        // Predicated region
        $region53: #{tpu_custom_call.1} parent=51 // pred_check
          %p823 = pneg %p157
        $region54: #{tpu_custom_call.1} parent=51 // pred_check_branch
          %825 = sbr.rel (%p823) target = $region56
        $region55: #{tpu_custom_call.1} parent=51 // pred_region
          %s826 = sand.u32 %s142, 1
          %s827 = scalar_lea.sflag [#allocation5], %s826
          %s828 = sand.u32 %s142, 1
          %s829 = scalar_lea.vmem [#allocation6], %s828
          %831 = dma.done %s827, 16
        $region56: #{tpu_custom_call.1} parent=51 // pred_fallthru
          _
      $region52: #{tpu_custom_call.1} parent=5 // pred_fallthru
        _
    $region6: #{tpu_custom_call.1} parent=1 // loop_footer
      %s22 = sadd.s32 1, %s18
    $region7: #{tpu_custom_call.1} parent=1 // loop_footer_branch
      %17 = sbr.rel target = $region3
    $region8: #{tpu_custom_call.1} parent=1 // loop_exit
      _
    %832 = vsyncpa [#allocation4], 1
    %s833 = scalar_lea.sflag [#allocation4], 1
    %834 = vsyncpa %s833, 1
    %835 = vsyncpa [#allocation5], 1
    %s836 = scalar_lea.sflag [#allocation5], 1
    %837 = vsyncpa %s836, 1

</llo_original>
